<compile_context>
chip_gen: v7x
topology: tpu7x:2x2x1
jax: 0.10.0
libtpu: 0.0.40
codegen_flags: <defaults>
</compile_context>

<pallas_src>
import functools

import jax
import jax.numpy as jnp
from jax.experimental import pallas as pl
from jax.experimental.pallas import tpu as pltpu


def _lstm_kernel(xg_ref, whh_ref, wlin_ref, blin_ref, out_ref, h_scr, c_scr,
                 *, batch_p, t_chunk, seq_len, hidden):
    """One time-chunk of the LSTM recurrence + (on the last chunk) the head.

    xg_ref:   (Tc*Bp, 4H)  precomputed x @ W_ih^T + (b_ih + b_hh), f32
    whh_ref:  (H, 4H)      hidden->gates weights, g-block pre-scaled x2, bf16
    wlin_ref: (H, Op)      linear head weights, zero-padded to Op lanes, f32
    blin_ref: (1, Op)      linear head bias, zero-padded, f32
    out_ref:  (Bp, Op)     head output (valid rows [:B], cols [:O])
    h_scr:    (Bp, H)      persistent hidden state across grid chunks, f32
    c_scr:    (Bp, H)      persistent cell state   across grid chunks, f32
    """
    Bp, Tc, H = batch_p, t_chunk, hidden
    needs_mask = (seq_len % Tc) != 0  # static: only trace masking if required

    # First chunk: zero-init the carried state.
    @pl.when(pl.program_id(0) == 0)
    def _():
        h_scr[...] = jnp.zeros(h_scr.shape, h_scr.dtype)
        c_scr[...] = jnp.zeros(c_scr.shape, c_scr.dtype)

    chunk_start = pl.program_id(0) * Tc

    def step(t, carry):
        h_bf, h, c = carry
        row = pl.multiple_of(t * Bp, Bp)          # 8-sublane-aligned slice start
        # W_hh is re-read from VMEM each iteration: bounded live range; vector
        # loads (3/cycle) are off the serial critical path.
        gates = (jnp.dot(h_bf, whh_ref[...],
                         preferred_element_type=jnp.float32)
                 + xg_ref[pl.ds(row, Bp), :])     # (Bp, 4H) f32
        # Single sigmoid over the whole 256-lane gate tile; g columns were
        # pre-scaled by 2 in the wrapper, so tanh(z) = 2*sigmoid(2z) - 1.
        s = jax.nn.sigmoid(gates)
        i_g = s[:, 0 * H:1 * H]
        f_g = s[:, 1 * H:2 * H]
        g_g = 2.0 * s[:, 2 * H:3 * H] - 1.0
        o_g = s[:, 3 * H:4 * H]
        c_new = f_g * c + i_g * g_g
        h_new = o_g * jnp.tanh(c_new)
        if needs_mask:
            valid = (chunk_start + t) < seq_len   # guard padded trailing steps
            h_new = jnp.where(valid, h_new, h)
            c_new = jnp.where(valid, c_new, c)
        # bf16 copy produced here so the next step's MXU issue isn't gated on it.
        return (h_new.astype(whh_ref.dtype), h_new, c_new)

    h0 = h_scr[...]
    c0 = c_scr[...]
    _, h, c = jax.lax.fori_loop(0, Tc, step,
                                (h0.astype(whh_ref.dtype), h0, c0),
                                unroll=min(8, Tc))

    h_scr[...] = h
    c_scr[...] = c

    # Last chunk: linear head on the final hidden state (lane-dense Op output).
    @pl.when(pl.program_id(0) == pl.num_programs(0) - 1)
    def _():
        out_ref[...] = (jnp.dot(h, wlin_ref[...],
                                preferred_element_type=jnp.float32)
                        + blin_ref[...])


def _pick_time_chunk(T, max_chunk=64, min_chunk=16):
    """Bounded per-program step count; prefer an exact divisor of T, otherwise
    mask the trailing steps of the last chunk (never unroll all of T)."""
    if T <= max_chunk:
        return T
    for c in range(max_chunk, min_chunk - 1, -1):
        if T % c == 0:
            return c
    return max_chunk


@functools.partial(jax.jit, static_argnames=())
def lstm_model_forward(x, params):
    """x: (B, T, I) batch-first (PyTorch convention). Returns (B, O) f32."""
    W_ih, W_hh, b_ih, b_hh, W_lin, b_lin = params
    B, T, I = x.shape
    H = W_hh.shape[1]            # W_hh: (4H, H)
    O = W_lin.shape[0]           # W_lin: (O, H)
    G = 4 * H                    # native gate width (256 for H=64: lane-dense)
    Bp = ((max(B, 8) + 7) // 8) * 8     # sublane-pad batch
    Op = ((O + 127) // 128) * 128       # lane-pad head output (1 -> 128)

    f32, bf16 = jnp.float32, jnp.bfloat16

    # Pre-scale the g-gate block (PyTorch gate order [i, f, g, o]) by 2 so the
    # kernel computes tanh via the same full-width sigmoid as the other gates.
    g_scale = jnp.ones((G, 1), f32).at[2 * H:3 * H].set(2.0)
    wih_t = (W_ih.astype(f32) * g_scale).T                        # (I, G)
    whh_t = (W_hh.astype(f32) * g_scale).T                        # (H, G)
    bias = ((b_ih + b_hh).astype(f32) * g_scale[:, 0])            # (G,)

    wlin_t = jnp.zeros((H, Op), f32).at[:, :O].set(W_lin.astype(f32).T)
    blin = jnp.zeros((1, Op), f32).at[0, :O].set(b_lin.astype(f32))

    # Hoisted input projection (+ fused bias) for ALL timesteps, done by XLA:
    # time-major so each kernel time-chunk is one contiguous row block.
    xg = jnp.transpose(x.astype(f32), (1, 0, 2)) @ wih_t + bias   # (T, B, G)

    Tc = _pick_time_chunk(T)
    num_chunks = pl.cdiv(T, Tc)
    # Pad time to whole chunks and batch to Bp sublanes; padded rows are zero
    # (no bias) and the LSTM maps them to exactly-zero state.
    xg = jnp.pad(xg, ((0, num_chunks * Tc - T), (0, Bp - B), (0, 0)))
    xg = xg.reshape(num_chunks * Tc * Bp, G)

    kernel = functools.partial(_lstm_kernel, batch_p=Bp, t_chunk=Tc,
                               seq_len=T, hidden=H)

    out = pl.pallas_call(
        kernel,
        out_shape=jax.ShapeDtypeStruct((Bp, Op), f32),
        grid_spec=pltpu.PrefetchScalarGridSpec(
            num_scalar_prefetch=0,
            grid=(num_chunks,),
            in_specs=[
                pl.BlockSpec((Tc * Bp, G), lambda t: (t, 0)),   # xg time chunk
                pl.BlockSpec((H, G), lambda t: (0, 0)),         # W_hh^T (bf16)
                pl.BlockSpec((H, Op), lambda t: (0, 0)),        # W_lin^T
                pl.BlockSpec((1, Op), lambda t: (0, 0)),        # b_lin
            ],
            out_specs=pl.BlockSpec((Bp, Op), lambda t: (0, 0)),
            scratch_shapes=[
                pltpu.VMEM((Bp, H), f32),   # h (persistent across chunks)
                pltpu.VMEM((Bp, H), f32),   # c (persistent across chunks)
            ],
        ),
        compiler_params=pltpu.CompilerParams(
            dimension_semantics=("arbitrary",)),
    )(xg, whh_t.astype(bf16), wlin_t, blin)
    return out[:B, :O]


def _lstm_reference(x, params):
    """Pure-JAX f32 reference of the PyTorch forward (gate order [i,f,g,o])."""
    W_ih, W_hh, b_ih, b_hh, W_lin, b_lin = params
    B, T, I = x.shape
    H = W_hh.shape[1]

    def step(carry, x_t):
        h, c = carry
        gates = x_t @ W_ih.T + b_ih + h @ W_hh.T + b_hh
        i_g = jax.nn.sigmoid(gates[:, 0 * H:1 * H])
        f_g = jax.nn.sigmoid(gates[:, 1 * H:2 * H])
        g_g = jnp.tanh(gates[:, 2 * H:3 * H])
        o_g = jax.nn.sigmoid(gates[:, 3 * H:4 * H])
        c = f_g * c + i_g * g_g
        h = o_g * jnp.tanh(c)
        return (h, c), None

    h0 = jnp.zeros((B, H), jnp.float32)
    c0 = jnp.zeros((B, H), jnp.float32)
    (h_T, _), _ = jax.lax.scan(step, (h0, c0), jnp.transpose(x, (1, 0, 2)))
    return h_T @ W_lin.T + b_lin


def init_params(key, input_size=3, hidden=64, output=1):
    # PyTorch initializes LSTM/Linear params with U(-1/sqrt(H), 1/sqrt(H)).
    ks = jax.random.split(key, 6)
    s = 1.0 / jnp.sqrt(jnp.float32(hidden))
    W_ih = jax.random.uniform(ks[0], (4 * hidden, input_size), jnp.float32, -s, s)
    W_hh = jax.random.uniform(ks[1], (4 * hidden, hidden), jnp.float32, -s, s)
    b_ih = jax.random.uniform(ks[2], (4 * hidden,), jnp.float32, -s, s)
    b_hh = jax.random.uniform(ks[3], (4 * hidden,), jnp.float32, -s, s)
    W_lin = jax.random.uniform(ks[4], (output, hidden), jnp.float32, -s, s)
    b_lin = jax.random.uniform(ks[5], (output,), jnp.float32, -s, s)
    return (W_ih, W_hh, b_ih, b_hh, W_lin, b_lin)


if __name__ == "__main__":
    key = jax.random.PRNGKey(0)
    k_x, k_p = jax.random.split(key)

    B, T, I = 2, 8, 3          # batch=2, seq=8, input_size=3 (module default)
    H, O = 64, 1
    params = init_params(k_p, input_size=I, hidden=H, output=O)
    x = jax.random.normal(k_x, (B, T, I), jnp.float32)

    out = jax.block_until_ready(lstm_model_forward(x, params))
    assert out.shape == (B, O), out.shape
    assert bool(jnp.all(jnp.isfinite(out)))

    # Kernel keeps all state math in f32; only h / W_hh hit the MXU in bf16,
    # so it should track the exact f32 reference tightly at T=8.
    ref = _lstm_reference(x, params)
    assert jnp.allclose(out, ref, atol=2e-2, rtol=2e-2), (out, ref)

    print("KERNEL_OK")
</pallas_src>

<mosaic_0001>
module attributes {stable_mosaic.version = 11 : i64} {
  func.func @_lstm_kernel(%arg0: i32, %arg1: memref<64x256xf32, #tpu.memory_space<vmem>>, %arg2: memref<64x256xbf16, #tpu.memory_space<vmem>>, %arg3: memref<64x128xf32, #tpu.memory_space<vmem>>, %arg4: memref<1x128xf32, #tpu.memory_space<vmem>>, %arg5: memref<8x128xf32, #tpu.memory_space<vmem>>, %arg6: memref<8x64xf32, #tpu.memory_space<vmem>>, %arg7: memref<8x64xf32, #tpu.memory_space<vmem>>) attributes {dimension_semantics = [#tpu.dimension_semantics<arbitrary>], iteration_bounds = array<i64: 1>, scalar_prefetch = 0 : i64, scratch_operands = 2 : i64, tpu.core_type = #tpu.core_type<tc>, window_params = [{transform_indices = @transform_0, window_bounds = array<i64: 64, 256>}, {pipeline_mode = #tpu.pipeline_mode<synchronous>, transform_indices = @transform_1, window_bounds = array<i64: 64, 256>}, {pipeline_mode = #tpu.pipeline_mode<synchronous>, transform_indices = @transform_2, window_bounds = array<i64: 64, 128>}, {pipeline_mode = #tpu.pipeline_mode<synchronous>, transform_indices = @transform_3, window_bounds = array<i64: 1, 128>}, {pipeline_mode = #tpu.pipeline_mode<synchronous>, transform_indices = @transform_4, window_bounds = array<i64: 8, 128>}]} {
    %c0_i32 = arith.constant 0 : i32
    %0 = arith.cmpi eq, %arg0, %c0_i32 : i32
    %1 = arith.extui %0 : i1 to i32
    %c0_i32_0 = arith.constant 0 : i32
    %2 = arith.cmpi ne, %1, %c0_i32_0 : i32
    scf.if %2 {
      %cst_74 = arith.constant 0.000000e+00 : f32
      %219 = vector.broadcast %cst_74 : f32 to vector<8x64xf32>
      %c0_75 = arith.constant 0 : index
      %c0_76 = arith.constant 0 : index
      %220 = vector.load %arg6[%c0_75, %c0_76] : memref<8x64xf32, #tpu.memory_space<vmem>>, vector<8x64xf32>
      tpu.vector_store %arg6[%c0_75, %c0_76], %219 {strides = array<i32>} : memref<8x64xf32, #tpu.memory_space<vmem>>, vector<8x64xf32>,
      %cst_77 = arith.constant 0.000000e+00 : f32
      %221 = vector.broadcast %cst_77 : f32 to vector<8x64xf32>
      %c0_78 = arith.constant 0 : index
      %c0_79 = arith.constant 0 : index
      %222 = vector.load %arg7[%c0_78, %c0_79] : memref<8x64xf32, #tpu.memory_space<vmem>>, vector<8x64xf32>
      tpu.vector_store %arg7[%c0_78, %c0_79], %221 {strides = array<i32>} : memref<8x64xf32, #tpu.memory_space<vmem>>, vector<8x64xf32>,
    } else {
    }
    %c0 = arith.constant 0 : index
    %c0_1 = arith.constant 0 : index
    %3 = vector.load %arg6[%c0, %c0_1] : memref<8x64xf32, #tpu.memory_space<vmem>>, vector<8x64xf32>
    %c0_2 = arith.constant 0 : index
    %c0_3 = arith.constant 0 : index
    %4 = vector.load %arg7[%c0_2, %c0_3] : memref<8x64xf32, #tpu.memory_space<vmem>>, vector<8x64xf32>
    %5 = arith.truncf %3 : vector<8x64xf32> to vector<8x64xbf16>
    %c0_i32_4 = arith.constant 0 : i32
    %c8_i32 = arith.constant 8 : i32
    %6 = arith.muli %c0_i32_4, %c8_i32 : i32
    %7 = tpu.assume_multiple %6, 8 : i32
    %c0_5 = arith.constant 0 : index
    %c0_6 = arith.constant 0 : index
    %8 = vector.load %arg2[%c0_5, %c0_6] : memref<64x256xbf16, #tpu.memory_space<vmem>>, vector<64x256xbf16>
    %cst = arith.constant dense<0.000000e+00> : vector<8x256xf32>
    %9 = tpu.matmul %5, %8, %cst {dimension_numbers = #tpu.dot_dimension_numbers<[1], [0], [0], [1], [0, 0, 1, 1], [], []>} : vector<8x64xbf16>, vector<64x256xbf16>, vector<8x256xf32> -> vector<8x256xf32>
    %10 = arith.index_cast %7 : i32 to index
    %c0_7 = arith.constant 0 : index
    %11 = vector.load %arg1[%10, %c0_7] : memref<64x256xf32, #tpu.memory_space<vmem>>, vector<8x256xf32>
    %12 = arith.addf %9, %11 : vector<8x256xf32>
    %13 = arith.negf %12 : vector<8x256xf32>
    %14 = math.exp %13 : vector<8x256xf32>
    %cst_8 = arith.constant 1.000000e+00 : f32
    %15 = vector.broadcast %cst_8 : f32 to vector<8x256xf32>
    %16 = arith.addf %15, %14 : vector<8x256xf32>
    %17 = arith.divf %15, %16 : vector<8x256xf32>
    %18 = vector.extract_strided_slice %17 {offsets = [0, 0], sizes = [8, 64], strides = [1, 1]} : vector<8x256xf32> to vector<8x64xf32>
    %19 = vector.extract_strided_slice %17 {offsets = [0, 64], sizes = [8, 64], strides = [1, 1]} : vector<8x256xf32> to vector<8x64xf32>
    %20 = vector.extract_strided_slice %17 {offsets = [0, 128], sizes = [8, 64], strides = [1, 1]} : vector<8x256xf32> to vector<8x64xf32>
    %cst_9 = arith.constant 2.000000e+00 : f32
    %21 = vector.broadcast %cst_9 : f32 to vector<8x64xf32>
    %22 = arith.mulf %21, %20 : vector<8x64xf32>
    %cst_10 = arith.constant 1.000000e+00 : f32
    %23 = vector.broadcast %cst_10 : f32 to vector<8x64xf32>
    %24 = arith.subf %22, %23 : vector<8x64xf32>
    %25 = vector.extract_strided_slice %17 {offsets = [0, 192], sizes = [8, 64], strides = [1, 1]} : vector<8x256xf32> to vector<8x64xf32>
    %26 = arith.mulf %19, %4 : vector<8x64xf32>
    %27 = arith.mulf %18, %24 : vector<8x64xf32>
    %28 = arith.addf %26, %27 : vector<8x64xf32>
    %29 = math.tanh %28 : vector<8x64xf32>
    %30 = arith.mulf %25, %29 : vector<8x64xf32>
    %31 = arith.truncf %30 : vector<8x64xf32> to vector<8x64xbf16>
    %c1_i32 = arith.constant 1 : i32
    %c8_i32_11 = arith.constant 8 : i32
    %32 = arith.muli %c1_i32, %c8_i32_11 : i32
    %33 = tpu.assume_multiple %32, 8 : i32
    %c0_12 = arith.constant 0 : index
    %c0_13 = arith.constant 0 : index
    %34 = vector.load %arg2[%c0_12, %c0_13] : memref<64x256xbf16, #tpu.memory_space<vmem>>, vector<64x256xbf16>
    %cst_14 = arith.constant dense<0.000000e+00> : vector<8x256xf32>
    %35 = tpu.matmul %31, %34, %cst_14 {dimension_numbers = #tpu.dot_dimension_numbers<[1], [0], [0], [1], [0, 0, 1, 1], [], []>} : vector<8x64xbf16>, vector<64x256xbf16>, vector<8x256xf32> -> vector<8x256xf32>
    %36 = arith.index_cast %33 : i32 to index
    %c0_15 = arith.constant 0 : index
    %37 = vector.load %arg1[%36, %c0_15] : memref<64x256xf32, #tpu.memory_space<vmem>>, vector<8x256xf32>
    %38 = arith.addf %35, %37 : vector<8x256xf32>
    %39 = arith.negf %38 : vector<8x256xf32>
    %40 = math.exp %39 : vector<8x256xf32>
    %cst_16 = arith.constant 1.000000e+00 : f32
    %41 = vector.broadcast %cst_16 : f32 to vector<8x256xf32>
    %42 = arith.addf %41, %40 : vector<8x256xf32>
    %43 = arith.divf %41, %42 : vector<8x256xf32>
    %44 = vector.extract_strided_slice %43 {offsets = [0, 0], sizes = [8, 64], strides = [1, 1]} : vector<8x256xf32> to vector<8x64xf32>
    %45 = vector.extract_strided_slice %43 {offsets = [0, 64], sizes = [8, 64], strides = [1, 1]} : vector<8x256xf32> to vector<8x64xf32>
    %46 = vector.extract_strided_slice %43 {offsets = [0, 128], sizes = [8, 64], strides = [1, 1]} : vector<8x256xf32> to vector<8x64xf32>
    %cst_17 = arith.constant 2.000000e+00 : f32
    %47 = vector.broadcast %cst_17 : f32 to vector<8x64xf32>
    %48 = arith.mulf %47, %46 : vector<8x64xf32>
    %cst_18 = arith.constant 1.000000e+00 : f32
    %49 = vector.broadcast %cst_18 : f32 to vector<8x64xf32>
    %50 = arith.subf %48, %49 : vector<8x64xf32>
    %51 = vector.extract_strided_slice %43 {offsets = [0, 192], sizes = [8, 64], strides = [1, 1]} : vector<8x256xf32> to vector<8x64xf32>
    %52 = arith.mulf %45, %28 : vector<8x64xf32>
    %53 = arith.mulf %44, %50 : vector<8x64xf32>
    %54 = arith.addf %52, %53 : vector<8x64xf32>
    %55 = math.tanh %54 : vector<8x64xf32>
    %56 = arith.mulf %51, %55 : vector<8x64xf32>
    %57 = arith.truncf %56 : vector<8x64xf32> to vector<8x64xbf16>
    %c2_i32 = arith.constant 2 : i32
    %c8_i32_19 = arith.constant 8 : i32
    %58 = arith.muli %c2_i32, %c8_i32_19 : i32
    %59 = tpu.assume_multiple %58, 8 : i32
    %c0_20 = arith.constant 0 : index
    %c0_21 = arith.constant 0 : index
    %60 = vector.load %arg2[%c0_20, %c0_21] : memref<64x256xbf16, #tpu.memory_space<vmem>>, vector<64x256xbf16>
    %cst_22 = arith.constant dense<0.000000e+00> : vector<8x256xf32>
    %61 = tpu.matmul %57, %60, %cst_22 {dimension_numbers = #tpu.dot_dimension_numbers<[1], [0], [0], [1], [0, 0, 1, 1], [], []>} : vector<8x64xbf16>, vector<64x256xbf16>, vector<8x256xf32> -> vector<8x256xf32>
    %62 = arith.index_cast %59 : i32 to index
    %c0_23 = arith.constant 0 : index
    %63 = vector.load %arg1[%62, %c0_23] : memref<64x256xf32, #tpu.memory_space<vmem>>, vector<8x256xf32>
    %64 = arith.addf %61, %63 : vector<8x256xf32>
    %65 = arith.negf %64 : vector<8x256xf32>
    %66 = math.exp %65 : vector<8x256xf32>
    %cst_24 = arith.constant 1.000000e+00 : f32
    %67 = vector.broadcast %cst_24 : f32 to vector<8x256xf32>
    %68 = arith.addf %67, %66 : vector<8x256xf32>
    %69 = arith.divf %67, %68 : vector<8x256xf32>
    %70 = vector.extract_strided_slice %69 {offsets = [0, 0], sizes = [8, 64], strides = [1, 1]} : vector<8x256xf32> to vector<8x64xf32>
    %71 = vector.extract_strided_slice %69 {offsets = [0, 64], sizes = [8, 64], strides = [1, 1]} : vector<8x256xf32> to vector<8x64xf32>
    %72 = vector.extract_strided_slice %69 {offsets = [0, 128], sizes = [8, 64], strides = [1, 1]} : vector<8x256xf32> to vector<8x64xf32>
    %cst_25 = arith.constant 2.000000e+00 : f32
    %73 = vector.broadcast %cst_25 : f32 to vector<8x64xf32>
    %74 = arith.mulf %73, %72 : vector<8x64xf32>
    %cst_26 = arith.constant 1.000000e+00 : f32
    %75 = vector.broadcast %cst_26 : f32 to vector<8x64xf32>
    %76 = arith.subf %74, %75 : vector<8x64xf32>
    %77 = vector.extract_strided_slice %69 {offsets = [0, 192], sizes = [8, 64], strides = [1, 1]} : vector<8x256xf32> to vector<8x64xf32>
    %78 = arith.mulf %71, %54 : vector<8x64xf32>
    %79 = arith.mulf %70, %76 : vector<8x64xf32>
    %80 = arith.addf %78, %79 : vector<8x64xf32>
    %81 = math.tanh %80 : vector<8x64xf32>
    %82 = arith.mulf %77, %81 : vector<8x64xf32>
    %83 = arith.truncf %82 : vector<8x64xf32> to vector<8x64xbf16>
    %c3_i32 = arith.constant 3 : i32
    %c8_i32_27 = arith.constant 8 : i32
    %84 = arith.muli %c3_i32, %c8_i32_27 : i32
    %85 = tpu.assume_multiple %84, 8 : i32
    %c0_28 = arith.constant 0 : index
    %c0_29 = arith.constant 0 : index
    %86 = vector.load %arg2[%c0_28, %c0_29] : memref<64x256xbf16, #tpu.memory_space<vmem>>, vector<64x256xbf16>
    %cst_30 = arith.constant dense<0.000000e+00> : vector<8x256xf32>
    %87 = tpu.matmul %83, %86, %cst_30 {dimension_numbers = #tpu.dot_dimension_numbers<[1], [0], [0], [1], [0, 0, 1, 1], [], []>} : vector<8x64xbf16>, vector<64x256xbf16>, vector<8x256xf32> -> vector<8x256xf32>
    %88 = arith.index_cast %85 : i32 to index
    %c0_31 = arith.constant 0 : index
    %89 = vector.load %arg1[%88, %c0_31] : memref<64x256xf32, #tpu.memory_space<vmem>>, vector<8x256xf32>
    %90 = arith.addf %87, %89 : vector<8x256xf32>
    %91 = arith.negf %90 : vector<8x256xf32>
    %92 = math.exp %91 : vector<8x256xf32>
    %cst_32 = arith.constant 1.000000e+00 : f32
    %93 = vector.broadcast %cst_32 : f32 to vector<8x256xf32>
    %94 = arith.addf %93, %92 : vector<8x256xf32>
    %95 = arith.divf %93, %94 : vector<8x256xf32>
    %96 = vector.extract_strided_slice %95 {offsets = [0, 0], sizes = [8, 64], strides = [1, 1]} : vector<8x256xf32> to vector<8x64xf32>
    %97 = vector.extract_strided_slice %95 {offsets = [0, 64], sizes = [8, 64], strides = [1, 1]} : vector<8x256xf32> to vector<8x64xf32>
    %98 = vector.extract_strided_slice %95 {offsets = [0, 128], sizes = [8, 64], strides = [1, 1]} : vector<8x256xf32> to vector<8x64xf32>
    %cst_33 = arith.constant 2.000000e+00 : f32
    %99 = vector.broadcast %cst_33 : f32 to vector<8x64xf32>
    %100 = arith.mulf %99, %98 : vector<8x64xf32>
    %cst_34 = arith.constant 1.000000e+00 : f32
    %101 = vector.broadcast %cst_34 : f32 to vector<8x64xf32>
    %102 = arith.subf %100, %101 : vector<8x64xf32>
    %103 = vector.extract_strided_slice %95 {offsets = [0, 192], sizes = [8, 64], strides = [1, 1]} : vector<8x256xf32> to vector<8x64xf32>
    %104 = arith.mulf %97, %80 : vector<8x64xf32>
    %105 = arith.mulf %96, %102 : vector<8x64xf32>
    %106 = arith.addf %104, %105 : vector<8x64xf32>
    %107 = math.tanh %106 : vector<8x64xf32>
    %108 = arith.mulf %103, %107 : vector<8x64xf32>
    %109 = arith.truncf %108 : vector<8x64xf32> to vector<8x64xbf16>
    %c4_i32 = arith.constant 4 : i32
    %c8_i32_35 = arith.constant 8 : i32
    %110 = arith.muli %c4_i32, %c8_i32_35 : i32
    %111 = tpu.assume_multiple %110, 8 : i32
    %c0_36 = arith.constant 0 : index
    %c0_37 = arith.constant 0 : index
    %112 = vector.load %arg2[%c0_36, %c0_37] : memref<64x256xbf16, #tpu.memory_space<vmem>>, vector<64x256xbf16>
    %cst_38 = arith.constant dense<0.000000e+00> : vector<8x256xf32>
    %113 = tpu.matmul %109, %112, %cst_38 {dimension_numbers = #tpu.dot_dimension_numbers<[1], [0], [0], [1], [0, 0, 1, 1], [], []>} : vector<8x64xbf16>, vector<64x256xbf16>, vector<8x256xf32> -> vector<8x256xf32>
    %114 = arith.index_cast %111 : i32 to index
    %c0_39 = arith.constant 0 : index
    %115 = vector.load %arg1[%114, %c0_39] : memref<64x256xf32, #tpu.memory_space<vmem>>, vector<8x256xf32>
    %116 = arith.addf %113, %115 : vector<8x256xf32>
    %117 = arith.negf %116 : vector<8x256xf32>
    %118 = math.exp %117 : vector<8x256xf32>
    %cst_40 = arith.constant 1.000000e+00 : f32
    %119 = vector.broadcast %cst_40 : f32 to vector<8x256xf32>
    %120 = arith.addf %119, %118 : vector<8x256xf32>
    %121 = arith.divf %119, %120 : vector<8x256xf32>
    %122 = vector.extract_strided_slice %121 {offsets = [0, 0], sizes = [8, 64], strides = [1, 1]} : vector<8x256xf32> to vector<8x64xf32>
    %123 = vector.extract_strided_slice %121 {offsets = [0, 64], sizes = [8, 64], strides = [1, 1]} : vector<8x256xf32> to vector<8x64xf32>
    %124 = vector.extract_strided_slice %121 {offsets = [0, 128], sizes = [8, 64], strides = [1, 1]} : vector<8x256xf32> to vector<8x64xf32>
    %cst_41 = arith.constant 2.000000e+00 : f32
    %125 = vector.broadcast %cst_41 : f32 to vector<8x64xf32>
    %126 = arith.mulf %125, %124 : vector<8x64xf32>
    %cst_42 = arith.constant 1.000000e+00 : f32
    %127 = vector.broadcast %cst_42 : f32 to vector<8x64xf32>
    %128 = arith.subf %126, %127 : vector<8x64xf32>
    %129 = vector.extract_strided_slice %121 {offsets = [0, 192], sizes = [8, 64], strides = [1, 1]} : vector<8x256xf32> to vector<8x64xf32>
    %130 = arith.mulf %123, %106 : vector<8x64xf32>
    %131 = arith.mulf %122, %128 : vector<8x64xf32>
    %132 = arith.addf %130, %131 : vector<8x64xf32>
    %133 = math.tanh %132 : vector<8x64xf32>
    %134 = arith.mulf %129, %133 : vector<8x64xf32>
    %135 = arith.truncf %134 : vector<8x64xf32> to vector<8x64xbf16>
    %c5_i32 = arith.constant 5 : i32
    %c8_i32_43 = arith.constant 8 : i32
    %136 = arith.muli %c5_i32, %c8_i32_43 : i32
    %137 = tpu.assume_multiple %136, 8 : i32
    %c0_44 = arith.constant 0 : index
    %c0_45 = arith.constant 0 : index
    %138 = vector.load %arg2[%c0_44, %c0_45] : memref<64x256xbf16, #tpu.memory_space<vmem>>, vector<64x256xbf16>
    %cst_46 = arith.constant dense<0.000000e+00> : vector<8x256xf32>
    %139 = tpu.matmul %135, %138, %cst_46 {dimension_numbers = #tpu.dot_dimension_numbers<[1], [0], [0], [1], [0, 0, 1, 1], [], []>} : vector<8x64xbf16>, vector<64x256xbf16>, vector<8x256xf32> -> vector<8x256xf32>
    %140 = arith.index_cast %137 : i32 to index
    %c0_47 = arith.constant 0 : index
    %141 = vector.load %arg1[%140, %c0_47] : memref<64x256xf32, #tpu.memory_space<vmem>>, vector<8x256xf32>
    %142 = arith.addf %139, %141 : vector<8x256xf32>
    %143 = arith.negf %142 : vector<8x256xf32>
    %144 = math.exp %143 : vector<8x256xf32>
    %cst_48 = arith.constant 1.000000e+00 : f32
    %145 = vector.broadcast %cst_48 : f32 to vector<8x256xf32>
    %146 = arith.addf %145, %144 : vector<8x256xf32>
    %147 = arith.divf %145, %146 : vector<8x256xf32>
    %148 = vector.extract_strided_slice %147 {offsets = [0, 0], sizes = [8, 64], strides = [1, 1]} : vector<8x256xf32> to vector<8x64xf32>
    %149 = vector.extract_strided_slice %147 {offsets = [0, 64], sizes = [8, 64], strides = [1, 1]} : vector<8x256xf32> to vector<8x64xf32>
    %150 = vector.extract_strided_slice %147 {offsets = [0, 128], sizes = [8, 64], strides = [1, 1]} : vector<8x256xf32> to vector<8x64xf32>
    %cst_49 = arith.constant 2.000000e+00 : f32
    %151 = vector.broadcast %cst_49 : f32 to vector<8x64xf32>
    %152 = arith.mulf %151, %150 : vector<8x64xf32>
    %cst_50 = arith.constant 1.000000e+00 : f32
    %153 = vector.broadcast %cst_50 : f32 to vector<8x64xf32>
    %154 = arith.subf %152, %153 : vector<8x64xf32>
    %155 = vector.extract_strided_slice %147 {offsets = [0, 192], sizes = [8, 64], strides = [1, 1]} : vector<8x256xf32> to vector<8x64xf32>
    %156 = arith.mulf %149, %132 : vector<8x64xf32>
    %157 = arith.mulf %148, %154 : vector<8x64xf32>
    %158 = arith.addf %156, %157 : vector<8x64xf32>
    %159 = math.tanh %158 : vector<8x64xf32>
    %160 = arith.mulf %155, %159 : vector<8x64xf32>
    %161 = arith.truncf %160 : vector<8x64xf32> to vector<8x64xbf16>
    %c6_i32 = arith.constant 6 : i32
    %c8_i32_51 = arith.constant 8 : i32
    %162 = arith.muli %c6_i32, %c8_i32_51 : i32
    %163 = tpu.assume_multiple %162, 8 : i32
    %c0_52 = arith.constant 0 : index
    %c0_53 = arith.constant 0 : index
    %164 = vector.load %arg2[%c0_52, %c0_53] : memref<64x256xbf16, #tpu.memory_space<vmem>>, vector<64x256xbf16>
    %cst_54 = arith.constant dense<0.000000e+00> : vector<8x256xf32>
    %165 = tpu.matmul %161, %164, %cst_54 {dimension_numbers = #tpu.dot_dimension_numbers<[1], [0], [0], [1], [0, 0, 1, 1], [], []>} : vector<8x64xbf16>, vector<64x256xbf16>, vector<8x256xf32> -> vector<8x256xf32>
    %166 = arith.index_cast %163 : i32 to index
    %c0_55 = arith.constant 0 : index
    %167 = vector.load %arg1[%166, %c0_55] : memref<64x256xf32, #tpu.memory_space<vmem>>, vector<8x256xf32>
    %168 = arith.addf %165, %167 : vector<8x256xf32>
    %169 = arith.negf %168 : vector<8x256xf32>
    %170 = math.exp %169 : vector<8x256xf32>
    %cst_56 = arith.constant 1.000000e+00 : f32
    %171 = vector.broadcast %cst_56 : f32 to vector<8x256xf32>
    %172 = arith.addf %171, %170 : vector<8x256xf32>
    %173 = arith.divf %171, %172 : vector<8x256xf32>
    %174 = vector.extract_strided_slice %173 {offsets = [0, 0], sizes = [8, 64], strides = [1, 1]} : vector<8x256xf32> to vector<8x64xf32>
    %175 = vector.extract_strided_slice %173 {offsets = [0, 64], sizes = [8, 64], strides = [1, 1]} : vector<8x256xf32> to vector<8x64xf32>
    %176 = vector.extract_strided_slice %173 {offsets = [0, 128], sizes = [8, 64], strides = [1, 1]} : vector<8x256xf32> to vector<8x64xf32>
    %cst_57 = arith.constant 2.000000e+00 : f32
    %177 = vector.broadcast %cst_57 : f32 to vector<8x64xf32>
    %178 = arith.mulf %177, %176 : vector<8x64xf32>
    %cst_58 = arith.constant 1.000000e+00 : f32
    %179 = vector.broadcast %cst_58 : f32 to vector<8x64xf32>
    %180 = arith.subf %178, %179 : vector<8x64xf32>
    %181 = vector.extract_strided_slice %173 {offsets = [0, 192], sizes = [8, 64], strides = [1, 1]} : vector<8x256xf32> to vector<8x64xf32>
    %182 = arith.mulf %175, %158 : vector<8x64xf32>
    %183 = arith.mulf %174, %180 : vector<8x64xf32>
    %184 = arith.addf %182, %183 : vector<8x64xf32>
    %185 = math.tanh %184 : vector<8x64xf32>
    %186 = arith.mulf %181, %185 : vector<8x64xf32>
    %187 = arith.truncf %186 : vector<8x64xf32> to vector<8x64xbf16>
    %c7_i32 = arith.constant 7 : i32
    %c8_i32_59 = arith.constant 8 : i32
    %188 = arith.muli %c7_i32, %c8_i32_59 : i32
    %189 = tpu.assume_multiple %188, 8 : i32
    %c0_60 = arith.constant 0 : index
    %c0_61 = arith.constant 0 : index
    %190 = vector.load %arg2[%c0_60, %c0_61] : memref<64x256xbf16, #tpu.memory_space<vmem>>, vector<64x256xbf16>
    %cst_62 = arith.constant dense<0.000000e+00> : vector<8x256xf32>
    %191 = tpu.matmul %187, %190, %cst_62 {dimension_numbers = #tpu.dot_dimension_numbers<[1], [0], [0], [1], [0, 0, 1, 1], [], []>} : vector<8x64xbf16>, vector<64x256xbf16>, vector<8x256xf32> -> vector<8x256xf32>
    %192 = arith.index_cast %189 : i32 to index
    %c0_63 = arith.constant 0 : index
    %193 = vector.load %arg1[%192, %c0_63] : memref<64x256xf32, #tpu.memory_space<vmem>>, vector<8x256xf32>
    %194 = arith.addf %191, %193 : vector<8x256xf32>
    %195 = arith.negf %194 : vector<8x256xf32>
    %196 = math.exp %195 : vector<8x256xf32>
    %cst_64 = arith.constant 1.000000e+00 : f32
    %197 = vector.broadcast %cst_64 : f32 to vector<8x256xf32>
    %198 = arith.addf %197, %196 : vector<8x256xf32>
    %199 = arith.divf %197, %198 : vector<8x256xf32>
    %200 = vector.extract_strided_slice %199 {offsets = [0, 0], sizes = [8, 64], strides = [1, 1]} : vector<8x256xf32> to vector<8x64xf32>
    %201 = vector.extract_strided_slice %199 {offsets = [0, 64], sizes = [8, 64], strides = [1, 1]} : vector<8x256xf32> to vector<8x64xf32>
    %202 = vector.extract_strided_slice %199 {offsets = [0, 128], sizes = [8, 64], strides = [1, 1]} : vector<8x256xf32> to vector<8x64xf32>
    %cst_65 = arith.constant 2.000000e+00 : f32
    %203 = vector.broadcast %cst_65 : f32 to vector<8x64xf32>
    %204 = arith.mulf %203, %202 : vector<8x64xf32>
    %cst_66 = arith.constant 1.000000e+00 : f32
    %205 = vector.broadcast %cst_66 : f32 to vector<8x64xf32>
    %206 = arith.subf %204, %205 : vector<8x64xf32>
    %207 = vector.extract_strided_slice %199 {offsets = [0, 192], sizes = [8, 64], strides = [1, 1]} : vector<8x256xf32> to vector<8x64xf32>
    %208 = arith.mulf %201, %184 : vector<8x64xf32>
    %209 = arith.mulf %200, %206 : vector<8x64xf32>
    %210 = arith.addf %208, %209 : vector<8x64xf32>
    %211 = math.tanh %210 : vector<8x64xf32>
    %212 = arith.mulf %207, %211 : vector<8x64xf32>
    %213 = arith.truncf %212 : vector<8x64xf32> to vector<8x64xbf16>
    %c8_i32_67 = arith.constant 8 : i32
    %c0_68 = arith.constant 0 : index
    %c0_69 = arith.constant 0 : index
    %214 = vector.load %arg6[%c0_68, %c0_69] : memref<8x64xf32, #tpu.memory_space<vmem>>, vector<8x64xf32>
    tpu.vector_store %arg6[%c0_68, %c0_69], %212 {strides = array<i32>} : memref<8x64xf32, #tpu.memory_space<vmem>>, vector<8x64xf32>,
    %c0_70 = arith.constant 0 : index
    %c0_71 = arith.constant 0 : index
    %215 = vector.load %arg7[%c0_70, %c0_71] : memref<8x64xf32, #tpu.memory_space<vmem>>, vector<8x64xf32>
    tpu.vector_store %arg7[%c0_70, %c0_71], %210 {strides = array<i32>} : memref<8x64xf32, #tpu.memory_space<vmem>>, vector<8x64xf32>,
    %c0_i32_72 = arith.constant 0 : i32
    %216 = arith.cmpi eq, %arg0, %c0_i32_72 : i32
    %217 = arith.extui %216 : i1 to i32
    %c0_i32_73 = arith.constant 0 : i32
    %218 = arith.cmpi ne, %217, %c0_i32_73 : i32
    scf.if %218 {
      %c0_74 = arith.constant 0 : index
      %c0_75 = arith.constant 0 : index
      %219 = vector.load %arg3[%c0_74, %c0_75] : memref<64x128xf32, #tpu.memory_space<vmem>>, vector<64x128xf32>
      %cst_76 = arith.constant dense<0.000000e+00> : vector<8x128xf32>
      %220 = tpu.matmul %212, %219, %cst_76 {dimension_numbers = #tpu.dot_dimension_numbers<[1], [0], [0], [1], [0, 0, 1, 1], [], []>} : vector<8x64xf32>, vector<64x128xf32>, vector<8x128xf32> -> vector<8x128xf32>
      %c0_77 = arith.constant 0 : index
      %c0_78 = arith.constant 0 : index
      %221 = vector.load %arg4[%c0_77, %c0_78] : memref<1x128xf32, #tpu.memory_space<vmem>>, vector<1x128xf32>
      %222 = vector.broadcast %221 : vector<1x128xf32> to vector<8x128xf32>
      %223 = arith.addf %220, %222 : vector<8x128xf32>
      %c0_79 = arith.constant 0 : index
      %c0_80 = arith.constant 0 : index
      %224 = vector.load %arg5[%c0_79, %c0_80] : memref<8x128xf32, #tpu.memory_space<vmem>>, vector<8x128xf32>
      tpu.vector_store %arg5[%c0_79, %c0_80], %223 {strides = array<i32>} : memref<8x128xf32, #tpu.memory_space<vmem>>, vector<8x128xf32>,
    } else {
    }
    return
  }
  func.func @transform_0(%arg0: i32) -> (i32, i32) {
    %c0_i32 = arith.constant 0 : i32
    %c0_i32_0 = arith.constant 0 : i32
    return %arg0, %c0_i32 : i32, i32
  }
  func.func @transform_1(%arg0: i32) -> (i32, i32) {
    %c0_i32 = arith.constant 0 : i32
    %c0_i32_0 = arith.constant 0 : i32
    %c0_i32_1 = arith.constant 0 : i32
    return %c0_i32, %c0_i32_0 : i32, i32
  }
  func.func @transform_2(%arg0: i32) -> (i32, i32) {
    %c0_i32 = arith.constant 0 : i32
    %c0_i32_0 = arith.constant 0 : i32
    %c0_i32_1 = arith.constant 0 : i32
    return %c0_i32, %c0_i32_0 : i32, i32
  }
  func.func @transform_3(%arg0: i32) -> (i32, i32) {
    %c0_i32 = arith.constant 0 : i32
    %c0_i32_0 = arith.constant 0 : i32
    %c0_i32_1 = arith.constant 0 : i32
    return %c0_i32, %c0_i32_0 : i32, i32
  }
  func.func @transform_4(%arg0: i32) -> (i32, i32) {
    %c0_i32 = arith.constant 0 : i32
    %c0_i32_0 = arith.constant 0 : i32
    %c0_i32_1 = arith.constant 0 : i32
    return %c0_i32, %c0_i32_0 : i32, i32
  }
}

</mosaic_0001>

<llo_original>
// kernel: lstm_model_forward.1
$region0: #{lstm_model_forward.1}
  #allocation0 [shape = 'u32[]', space=smem, size = 0x4, offset = 0x4, fixed_abs, tag = 'smem constant byte address 0x4 - core index']
  #allocation1 [shape = 'u32[144,128]{1,0:T(1,128)}', space=vmem, size = 0x12000, scoped, tag = 'internal scratch']
  #allocation2 [shape = 'f32[8,64]{1,0:T(8,128)}', space=vmem, size = 0x1000, scoped, tag = 'scratch operand']
  #allocation3 [shape = 'f32[8,64]{1,0:T(8,128)}', space=vmem, size = 0x1000, scoped, tag = 'scratch operand']
  %s0 = inlined_call_operand.vmem [shape: f32[64,256], index: 0, kind: input, shape index: {}]
  %s1 = inlined_call_operand.vmem [shape: bf16[64,256], index: 1, kind: input, shape index: {}]
  %s2 = inlined_call_operand.vmem [shape: f32[64,128], index: 2, kind: input, shape index: {}]
  %s3 = inlined_call_operand.vmem [shape: f32[1,128], index: 3, kind: input, shape index: {}]
  %s4 = inlined_call_operand.vmem [shape: f32[8,128], index: 4, kind: output, shape index: {}]
  %s5 = sld [smem:[#allocation0]]
  $region34: #{lstm_model_forward.1} parent=0
    _
  %s7 = ssub.s32 1, %s5
  %s8 = scalar_select 0, %s7, %s5
  // Predicated region
  $region2: #{lstm_model_forward.1} parent=0 // pred_check
    _
  $region3: #{lstm_model_forward.1} parent=0 // pred_check_branch
    %10 = sbr.rel (0) target = $region5
  $region4: #{lstm_model_forward.1} parent=0 // pred_region
    _
  $region5: #{lstm_model_forward.1} parent=0 // pred_fallthru
    _
  // Predicated region
  $region6: #{lstm_model_forward.1} parent=0 // pred_check
    _
  $region7: #{lstm_model_forward.1} parent=0 // pred_check_branch
    %12 = sbr.rel (0) target = $region9
  $region8: #{lstm_model_forward.1} parent=0 // pred_region
    _
  $region9: #{lstm_model_forward.1} parent=0 // pred_fallthru
    _
  // Predicated region
  $region10: #{lstm_model_forward.1} parent=0 // pred_check
    _
  $region11: #{lstm_model_forward.1} parent=0 // pred_check_branch
    %14 = sbr.rel (0) target = $region13
  $region12: #{lstm_model_forward.1} parent=0 // pred_region
    _
  $region13: #{lstm_model_forward.1} parent=0 // pred_fallthru
    _
  // Predicated region
  $region14: #{lstm_model_forward.1} parent=0 // pred_check
    _
  $region15: #{lstm_model_forward.1} parent=0 // pred_check_branch
    %16 = sbr.rel (0) target = $region17
  $region16: #{lstm_model_forward.1} parent=0 // pred_region
    _
  $region17: #{lstm_model_forward.1} parent=0 // pred_fallthru
    _
  %p18 = scmp.eq.s32.totalorder 0, 0
  // Predicated region
  $region18: #{lstm_model_forward.1} parent=0 // pred_check
    %p19 = pneg %p18
  $region19: #{lstm_model_forward.1} parent=0 // pred_check_branch
    %21 = sbr.rel (%p19) target = $region21
  $region20: #{lstm_model_forward.1} parent=0 // pred_region
    %vm22 = vcmask 523264
    %23 = vst.msk [vmem:[#allocation2] sm:$0xff] %vm22, 0.0
    %24 = vst.msk [vmem:[#allocation3] sm:$0xff] %vm22, 0.0
  $region21: #{lstm_model_forward.1} parent=0 // pred_fallthru
    _
  %v25 = vld [vmem:[#allocation2] sm:$0xff]
  %v26 = vld [vmem:[#allocation3] sm:$0xff]
  %v27 = vpack.c.bf16 %v25, %v25
  %v28 = vld [vmem:[%s1] sm:$0xff]
  %v29 = vld [vmem:[%s1 + $0x8] sm:$0xff]
  %v30 = vld [vmem:[%s1 + $0x10] sm:$0xff]
  %v31 = vld [vmem:[%s1 + $0x18] sm:$0xff]
  %v32 = vld [vmem:[%s1 + $0x20] sm:$0xff]
  %v33 = vld [vmem:[%s1 + $0x28] sm:$0xff]
  %v34 = vld [vmem:[%s1 + $0x30] sm:$0xff]
  %v35 = vld [vmem:[%s1 + $0x38] sm:$0xff]
  %s36 = smul.u32 0, 2
  %s37 = smul.addr %s36, 8
  %s38 = scalar_lea.vmem %s0, %s37
  %v39 = vld [vmem:[%s38] sm:$0xff]
  %v40 = vld [vmem:[%s38 + $0x8] sm:$0xff]
  %v49 = vunpack.c.l.b16 %v28
  %v50 = vunpack.c.h.b16 %v28
  %v51 = vunpack.c.l.b16 %v29
  %v52 = vunpack.c.h.b16 %v29
  %v53 = vunpack.c.l.b16 %v30
  %v54 = vunpack.c.h.b16 %v30
  %v55 = vunpack.c.l.b16 %v31
  %v56 = vunpack.c.h.b16 %v31
  %v57 = vunpack.c.l.b16 %v32
  %v58 = vunpack.c.h.b16 %v32
  %v59 = vunpack.c.l.b16 %v33
  %v60 = vunpack.c.h.b16 %v33
  %v61 = vunpack.c.l.b16 %v34
  %v62 = vunpack.c.h.b16 %v34
  %v63 = vunpack.c.l.b16 %v35
  %v64 = vunpack.c.h.b16 %v35
  %v65 = vpack.c.b16 %v51, %v49
  %v66 = vpack.c.b16 %v52, %v50
  %v67 = vpack.c.b16 %v55, %v53
  %v68 = vpack.c.b16 %v56, %v54
  %v69 = vpack.c.b16 %v59, %v57
  %v70 = vpack.c.b16 %v60, %v58
  %v71 = vpack.c.b16 %v63, %v61
  %v72 = vpack.c.b16 %v64, %v62
  %vm81 = vcmask 523264
  %v83 = vsel %vm81, %v27, 0
  %85 = vmatprep.subr.bf16.mxu0 %v66
  %86 = vmatpush1.bf16.msra.mxu0 %v65
  %87 = vmatprep.subr.bf16.mxu0 %v68
  %88 = vmatpush1.bf16.msra.mxu0 %v67
  %89 = vmatprep.subr.bf16.mxu0 %v70
  %90 = vmatpush1.bf16.msra.mxu0 %v69
  %91 = vmatprep.subr.bf16.mxu0 %v72
  %92 = vmatpush1.bf16.msra.mxu0 %v71
  %93 = vmatprep.subr.bf16.mxu0 0
  %94 = vmatpush1.bf16.msra.mxu0 0
  %95 = vmatprep.subr.bf16.mxu0 0
  %96 = vmatpush1.bf16.msra.mxu0 0
  %97 = vmatprep.subr.bf16.mxu0 0
  %98 = vmatpush1.bf16.msra.mxu0 0
  %99 = vmatprep.subr.bf16.mxu0 0
  %100 = vmatpush1.bf16.msra.mxu0 0
  %101 = vmatprep.subr.bf16.mxu0 0
  %102 = vmatpush1.bf16.msra.mxu0 0
  %103 = vmatprep.subr.bf16.mxu0 0
  %104 = vmatpush1.bf16.msra.mxu0 0
  %105 = vmatprep.subr.bf16.mxu0 0
  %106 = vmatpush1.bf16.msra.mxu0 0
  %107 = vmatprep.subr.bf16.mxu0 0
  %108 = vmatpush1.bf16.msra.mxu0 0
  %109 = vmatprep.subr.bf16.mxu0 0
  %110 = vmatpush1.bf16.msra.mxu0 0
  %111 = vmatprep.subr.bf16.mxu0 0
  %112 = vmatpush1.bf16.msra.mxu0 0
  %113 = vmatprep.subr.bf16.mxu0 0
  %114 = vmatpush1.bf16.msra.mxu0 0
  %115 = vmatprep.subr.bf16.mxu0 0
  %116 = vmatpush1.bf16.msra.mxu0 0
  %117 = vmatprep.mubr.bf16.mxu0 0
  %118 = vmatmul.mubr.bf16.gmra.mrb[0].mxu0 %v83
  %v119 = vpop.f32.mrb[0].mxu0
  %v120 = vadd.f32 %v39, %v119
  %v121 = vpop.f32.mrb[0].mxu0
  %v122 = vadd.f32 %v40, %v121
  %v123 = vpop.f32.mrb[0].mxu0
  %v124 = vpop.f32.mrb[0].mxu0
  %125 = vdwg.mxu0
  %v126 = vxor.u32 %v120, 2147483648
  %v127 = vxor.u32 %v122, 2147483648
  %v128 = vmul.f32 %v126, 1.442695
  %v129 = vpow.pop %v128
  %v130 = vmul.f32 %v127, 1.442695
  %v131 = vpow.pop %v130
  %v132 = vadd.f32 %v129, 1.0
  %v133 = vadd.f32 %v131, 1.0
  %v134 = vrcp.pop %v132
  %v135 = vmul.f32 1.0, %v134
  %v136 = vrcp.pop %v133
  %v137 = vmul.f32 1.0, %v136
  %v138 = vmul.f32 %v137, 2.0
  %v139 = vsub.f32 %v138, 1.0
  %141 = vrot.lane.b32.xlu0 %v26, 64
  %v142 = vpop.permute.xlu0 %141
  %v144 = vmul.f32 %v135, %v142
  %v145 = vmul.f32 %v135, %v139
  %147 = vrot.lane.b32.xlu0 %v145, 64
  %v148 = vpop.permute.xlu0 %147
  %v150 = vadd.f32 %v144, %v148
  %v151 = vtanh.pop %v150
  %v152 = vmul.f32 %v137, %v151
  %v153 = vpack.c.bf16 %v152, %v152
  %s154 = smul.u32 1, 2
  %s155 = smul.addr %s154, 8
  %s156 = scalar_lea.vmem %s0, %s155
  %v157 = vld [vmem:[%s156] sm:$0xff]
  %v158 = vld [vmem:[%s156 + $0x8] sm:$0xff]
  %160 = vrot.lane.b32.xlu0 %v153, 64
  %v161 = vpop.permute.xlu0 %160
  %v163 = vsel %vm81, %v161, 0
  %165 = vmatprep.subr.bf16.mxu0 %v66
  %166 = vmatpush1.bf16.msra.mxu0 %v65
  %167 = vmatprep.subr.bf16.mxu0 %v68
  %168 = vmatpush1.bf16.msra.mxu0 %v67
  %169 = vmatprep.subr.bf16.mxu0 %v70
  %170 = vmatpush1.bf16.msra.mxu0 %v69
  %171 = vmatprep.subr.bf16.mxu0 %v72
  %172 = vmatpush1.bf16.msra.mxu0 %v71
  %173 = vmatprep.subr.bf16.mxu0 0
  %174 = vmatpush1.bf16.msra.mxu0 0
  %175 = vmatprep.subr.bf16.mxu0 0
  %176 = vmatpush1.bf16.msra.mxu0 0
  %177 = vmatprep.subr.bf16.mxu0 0
  %178 = vmatpush1.bf16.msra.mxu0 0
  %179 = vmatprep.subr.bf16.mxu0 0
  %180 = vmatpush1.bf16.msra.mxu0 0
  %181 = vmatprep.subr.bf16.mxu0 0
  %182 = vmatpush1.bf16.msra.mxu0 0
  %183 = vmatprep.subr.bf16.mxu0 0
  %184 = vmatpush1.bf16.msra.mxu0 0
  %185 = vmatprep.subr.bf16.mxu0 0
  %186 = vmatpush1.bf16.msra.mxu0 0
  %187 = vmatprep.subr.bf16.mxu0 0
  %188 = vmatpush1.bf16.msra.mxu0 0
  %189 = vmatprep.subr.bf16.mxu0 0
  %190 = vmatpush1.bf16.msra.mxu0 0
  %191 = vmatprep.subr.bf16.mxu0 0
  %192 = vmatpush1.bf16.msra.mxu0 0
  %193 = vmatprep.subr.bf16.mxu0 0
  %194 = vmatpush1.bf16.msra.mxu0 0
  %195 = vmatprep.subr.bf16.mxu0 0
  %196 = vmatpush1.bf16.msra.mxu0 0
  %197 = vmatprep.mubr.bf16.mxu0 0
  %198 = vmatmul.mubr.bf16.gmra.mrb[0].mxu0 %v163
  %v199 = vpop.f32.mrb[0].mxu0
  %v200 = vadd.f32 %v157, %v199
  %v201 = vpop.f32.mrb[0].mxu0
  %v202 = vadd.f32 %v158, %v201
  %v203 = vpop.f32.mrb[0].mxu0
  %v204 = vpop.f32.mrb[0].mxu0
  %205 = vdwg.mxu0
  %v206 = vxor.u32 %v200, 2147483648
  %v207 = vxor.u32 %v202, 2147483648
  %v208 = vmul.f32 %v206, 1.442695
  %v209 = vpow.pop %v208
  %v210 = vmul.f32 %v207, 1.442695
  %v211 = vpow.pop %v210
  %v212 = vadd.f32 %v209, 1.0
  %v213 = vadd.f32 %v211, 1.0
  %v214 = vrcp.pop %v212
  %v215 = vmul.f32 1.0, %v214
  %v216 = vrcp.pop %v213
  %v217 = vmul.f32 1.0, %v216
  %v218 = vmul.f32 %v217, 2.0
  %v219 = vsub.f32 %v218, 1.0
  %v220 = vmul.f32 %v215, %v150
  %v221 = vmul.f32 %v215, %v219
  %223 = vrot.lane.b32.xlu0 %v221, 64
  %v224 = vpop.permute.xlu0 %223
  %v226 = vadd.f32 %v220, %v224
  %v227 = vtanh.pop %v226
  %v228 = vmul.f32 %v217, %v227
  %v229 = vpack.c.bf16 %v228, %v228
  %s230 = smul.u32 2, 2
  %s231 = smul.addr %s230, 8
  %s232 = scalar_lea.vmem %s0, %s231
  %v233 = vld [vmem:[%s232] sm:$0xff]
  %v234 = vld [vmem:[%s232 + $0x8] sm:$0xff]
  %236 = vrot.lane.b32.xlu0 %v229, 64
  %v237 = vpop.permute.xlu0 %236
  %v239 = vsel %vm81, %v237, 0
  %241 = vmatprep.subr.bf16.mxu0 %v66
  %242 = vmatpush1.bf16.msra.mxu0 %v65
  %243 = vmatprep.subr.bf16.mxu0 %v68
  %244 = vmatpush1.bf16.msra.mxu0 %v67
  %245 = vmatprep.subr.bf16.mxu0 %v70
  %246 = vmatpush1.bf16.msra.mxu0 %v69
  %247 = vmatprep.subr.bf16.mxu0 %v72
  %248 = vmatpush1.bf16.msra.mxu0 %v71
  %249 = vmatprep.subr.bf16.mxu0 0
  %250 = vmatpush1.bf16.msra.mxu0 0
  %251 = vmatprep.subr.bf16.mxu0 0
  %252 = vmatpush1.bf16.msra.mxu0 0
  %253 = vmatprep.subr.bf16.mxu0 0
  %254 = vmatpush1.bf16.msra.mxu0 0
  %255 = vmatprep.subr.bf16.mxu0 0
  %256 = vmatpush1.bf16.msra.mxu0 0
  %257 = vmatprep.subr.bf16.mxu0 0
  %258 = vmatpush1.bf16.msra.mxu0 0
  %259 = vmatprep.subr.bf16.mxu0 0
  %260 = vmatpush1.bf16.msra.mxu0 0
  %261 = vmatprep.subr.bf16.mxu0 0
  %262 = vmatpush1.bf16.msra.mxu0 0
  %263 = vmatprep.subr.bf16.mxu0 0
  %264 = vmatpush1.bf16.msra.mxu0 0
  %265 = vmatprep.subr.bf16.mxu0 0
  %266 = vmatpush1.bf16.msra.mxu0 0
  %267 = vmatprep.subr.bf16.mxu0 0
  %268 = vmatpush1.bf16.msra.mxu0 0
  %269 = vmatprep.subr.bf16.mxu0 0
  %270 = vmatpush1.bf16.msra.mxu0 0
  %271 = vmatprep.subr.bf16.mxu0 0
  %272 = vmatpush1.bf16.msra.mxu0 0
  %273 = vmatprep.mubr.bf16.mxu0 0
  %274 = vmatmul.mubr.bf16.gmra.mrb[0].mxu0 %v239
  %v275 = vpop.f32.mrb[0].mxu0
  %v276 = vadd.f32 %v233, %v275
  %v277 = vpop.f32.mrb[0].mxu0
  %v278 = vadd.f32 %v234, %v277
  %v279 = vpop.f32.mrb[0].mxu0
  %v280 = vpop.f32.mrb[0].mxu0
  %281 = vdwg.mxu0
  %v282 = vxor.u32 %v276, 2147483648
  %v283 = vxor.u32 %v278, 2147483648
  %v284 = vmul.f32 %v282, 1.442695
  %v285 = vpow.pop %v284
  %v286 = vmul.f32 %v283, 1.442695
  %v287 = vpow.pop %v286
  %v288 = vadd.f32 %v285, 1.0
  %v289 = vadd.f32 %v287, 1.0
  %v290 = vrcp.pop %v288
  %v291 = vmul.f32 1.0, %v290
  %v292 = vrcp.pop %v289
  %v293 = vmul.f32 1.0, %v292
  %v294 = vmul.f32 %v293, 2.0
  %v295 = vsub.f32 %v294, 1.0
  %v296 = vmul.f32 %v291, %v226
  %v297 = vmul.f32 %v291, %v295
  %299 = vrot.lane.b32.xlu0 %v297, 64
  %v300 = vpop.permute.xlu0 %299
  %v302 = vadd.f32 %v296, %v300
  %v303 = vtanh.pop %v302
  %v304 = vmul.f32 %v293, %v303
  %v305 = vpack.c.bf16 %v304, %v304
  %s306 = smul.u32 3, 2
  %s307 = smul.addr %s306, 8
  %s308 = scalar_lea.vmem %s0, %s307
  %v309 = vld [vmem:[%s308] sm:$0xff]
  %v310 = vld [vmem:[%s308 + $0x8] sm:$0xff]
  %312 = vrot.lane.b32.xlu0 %v305, 64
  %v313 = vpop.permute.xlu0 %312
  %v315 = vsel %vm81, %v313, 0
  %317 = vmatprep.subr.bf16.mxu0 %v66
  %318 = vmatpush1.bf16.msra.mxu0 %v65
  %319 = vmatprep.subr.bf16.mxu0 %v68
  %320 = vmatpush1.bf16.msra.mxu0 %v67
  %321 = vmatprep.subr.bf16.mxu0 %v70
  %322 = vmatpush1.bf16.msra.mxu0 %v69
  %323 = vmatprep.subr.bf16.mxu0 %v72
  %324 = vmatpush1.bf16.msra.mxu0 %v71
  %325 = vmatprep.subr.bf16.mxu0 0
  %326 = vmatpush1.bf16.msra.mxu0 0
  %327 = vmatprep.subr.bf16.mxu0 0
  %328 = vmatpush1.bf16.msra.mxu0 0
  %329 = vmatprep.subr.bf16.mxu0 0
  %330 = vmatpush1.bf16.msra.mxu0 0
  %331 = vmatprep.subr.bf16.mxu0 0
  %332 = vmatpush1.bf16.msra.mxu0 0
  %333 = vmatprep.subr.bf16.mxu0 0
  %334 = vmatpush1.bf16.msra.mxu0 0
  %335 = vmatprep.subr.bf16.mxu0 0
  %336 = vmatpush1.bf16.msra.mxu0 0
  %337 = vmatprep.subr.bf16.mxu0 0
  %338 = vmatpush1.bf16.msra.mxu0 0
  %339 = vmatprep.subr.bf16.mxu0 0
  %340 = vmatpush1.bf16.msra.mxu0 0
  %341 = vmatprep.subr.bf16.mxu0 0
  %342 = vmatpush1.bf16.msra.mxu0 0
  %343 = vmatprep.subr.bf16.mxu0 0
  %344 = vmatpush1.bf16.msra.mxu0 0
  %345 = vmatprep.subr.bf16.mxu0 0
  %346 = vmatpush1.bf16.msra.mxu0 0
  %347 = vmatprep.subr.bf16.mxu0 0
  %348 = vmatpush1.bf16.msra.mxu0 0
  %349 = vmatprep.mubr.bf16.mxu0 0
  %350 = vmatmul.mubr.bf16.gmra.mrb[0].mxu0 %v315
  %v351 = vpop.f32.mrb[0].mxu0
  %v352 = vadd.f32 %v309, %v351
  %v353 = vpop.f32.mrb[0].mxu0
  %v354 = vadd.f32 %v310, %v353
  %v355 = vpop.f32.mrb[0].mxu0
  %v356 = vpop.f32.mrb[0].mxu0
  %357 = vdwg.mxu0
  %v358 = vxor.u32 %v352, 2147483648
  %v359 = vxor.u32 %v354, 2147483648
  %v360 = vmul.f32 %v358, 1.442695
  %v361 = vpow.pop %v360
  %v362 = vmul.f32 %v359, 1.442695
  %v363 = vpow.pop %v362
  %v364 = vadd.f32 %v361, 1.0
  %v365 = vadd.f32 %v363, 1.0
  %v366 = vrcp.pop %v364
  %v367 = vmul.f32 1.0, %v366
  %v368 = vrcp.pop %v365
  %v369 = vmul.f32 1.0, %v368
  %v370 = vmul.f32 %v369, 2.0
  %v371 = vsub.f32 %v370, 1.0
  %v372 = vmul.f32 %v367, %v302
  %v373 = vmul.f32 %v367, %v371
  %375 = vrot.lane.b32.xlu0 %v373, 64
  %v376 = vpop.permute.xlu0 %375
  %v378 = vadd.f32 %v372, %v376
  %v379 = vtanh.pop %v378
  %v380 = vmul.f32 %v369, %v379
  %v381 = vpack.c.bf16 %v380, %v380
  %s382 = smul.u32 4, 2
  %s383 = smul.addr %s382, 8
  %s384 = scalar_lea.vmem %s0, %s383
  %v385 = vld [vmem:[%s384] sm:$0xff]
  %v386 = vld [vmem:[%s384 + $0x8] sm:$0xff]
  %388 = vrot.lane.b32.xlu0 %v381, 64
  %v389 = vpop.permute.xlu0 %388
  %v391 = vsel %vm81, %v389, 0
  %393 = vmatprep.subr.bf16.mxu0 %v66
  %394 = vmatpush1.bf16.msra.mxu0 %v65
  %395 = vmatprep.subr.bf16.mxu0 %v68
  %396 = vmatpush1.bf16.msra.mxu0 %v67
  %397 = vmatprep.subr.bf16.mxu0 %v70
  %398 = vmatpush1.bf16.msra.mxu0 %v69
  %399 = vmatprep.subr.bf16.mxu0 %v72
  %400 = vmatpush1.bf16.msra.mxu0 %v71
  %401 = vmatprep.subr.bf16.mxu0 0
  %402 = vmatpush1.bf16.msra.mxu0 0
  %403 = vmatprep.subr.bf16.mxu0 0
  %404 = vmatpush1.bf16.msra.mxu0 0
  %405 = vmatprep.subr.bf16.mxu0 0
  %406 = vmatpush1.bf16.msra.mxu0 0
  %407 = vmatprep.subr.bf16.mxu0 0
  %408 = vmatpush1.bf16.msra.mxu0 0
  %409 = vmatprep.subr.bf16.mxu0 0
  %410 = vmatpush1.bf16.msra.mxu0 0
  %411 = vmatprep.subr.bf16.mxu0 0
  %412 = vmatpush1.bf16.msra.mxu0 0
  %413 = vmatprep.subr.bf16.mxu0 0
  %414 = vmatpush1.bf16.msra.mxu0 0
  %415 = vmatprep.subr.bf16.mxu0 0
  %416 = vmatpush1.bf16.msra.mxu0 0
  %417 = vmatprep.subr.bf16.mxu0 0
  %418 = vmatpush1.bf16.msra.mxu0 0
  %419 = vmatprep.subr.bf16.mxu0 0
  %420 = vmatpush1.bf16.msra.mxu0 0
  %421 = vmatprep.subr.bf16.mxu0 0
  %422 = vmatpush1.bf16.msra.mxu0 0
  %423 = vmatprep.subr.bf16.mxu0 0
  %424 = vmatpush1.bf16.msra.mxu0 0
  %425 = vmatprep.mubr.bf16.mxu0 0
  %426 = vmatmul.mubr.bf16.gmra.mrb[0].mxu0 %v391
  %v427 = vpop.f32.mrb[0].mxu0
  %v428 = vadd.f32 %v385, %v427
  %v429 = vpop.f32.mrb[0].mxu0
  %v430 = vadd.f32 %v386, %v429
  %v431 = vpop.f32.mrb[0].mxu0
  %v432 = vpop.f32.mrb[0].mxu0
  %433 = vdwg.mxu0
  %v434 = vxor.u32 %v428, 2147483648
  %v435 = vxor.u32 %v430, 2147483648
  %v436 = vmul.f32 %v434, 1.442695
  %v437 = vpow.pop %v436
  %v438 = vmul.f32 %v435, 1.442695
  %v439 = vpow.pop %v438
  %v440 = vadd.f32 %v437, 1.0
  %v441 = vadd.f32 %v439, 1.0
  %v442 = vrcp.pop %v440
  %v443 = vmul.f32 1.0, %v442
  %v444 = vrcp.pop %v441
  %v445 = vmul.f32 1.0, %v444
  %v446 = vmul.f32 %v445, 2.0
  %v447 = vsub.f32 %v446, 1.0
  %v448 = vmul.f32 %v443, %v378
  %v449 = vmul.f32 %v443, %v447
  %451 = vrot.lane.b32.xlu0 %v449, 64
  %v452 = vpop.permute.xlu0 %451
  %v454 = vadd.f32 %v448, %v452
  %v455 = vtanh.pop %v454
  %v456 = vmul.f32 %v445, %v455
  %v457 = vpack.c.bf16 %v456, %v456
  %s458 = smul.u32 5, 2
  %s459 = smul.addr %s458, 8
  %s460 = scalar_lea.vmem %s0, %s459
  %v461 = vld [vmem:[%s460] sm:$0xff]
  %v462 = vld [vmem:[%s460 + $0x8] sm:$0xff]
  %464 = vrot.lane.b32.xlu0 %v457, 64
  %v465 = vpop.permute.xlu0 %464
  %v467 = vsel %vm81, %v465, 0
  %469 = vmatprep.subr.bf16.mxu0 %v66
  %470 = vmatpush1.bf16.msra.mxu0 %v65
  %471 = vmatprep.subr.bf16.mxu0 %v68
  %472 = vmatpush1.bf16.msra.mxu0 %v67
  %473 = vmatprep.subr.bf16.mxu0 %v70
  %474 = vmatpush1.bf16.msra.mxu0 %v69
  %475 = vmatprep.subr.bf16.mxu0 %v72
  %476 = vmatpush1.bf16.msra.mxu0 %v71
  %477 = vmatprep.subr.bf16.mxu0 0
  %478 = vmatpush1.bf16.msra.mxu0 0
  %479 = vmatprep.subr.bf16.mxu0 0
  %480 = vmatpush1.bf16.msra.mxu0 0
  %481 = vmatprep.subr.bf16.mxu0 0
  %482 = vmatpush1.bf16.msra.mxu0 0
  %483 = vmatprep.subr.bf16.mxu0 0
  %484 = vmatpush1.bf16.msra.mxu0 0
  %485 = vmatprep.subr.bf16.mxu0 0
  %486 = vmatpush1.bf16.msra.mxu0 0
  %487 = vmatprep.subr.bf16.mxu0 0
  %488 = vmatpush1.bf16.msra.mxu0 0
  %489 = vmatprep.subr.bf16.mxu0 0
  %490 = vmatpush1.bf16.msra.mxu0 0
  %491 = vmatprep.subr.bf16.mxu0 0
  %492 = vmatpush1.bf16.msra.mxu0 0
  %493 = vmatprep.subr.bf16.mxu0 0
  %494 = vmatpush1.bf16.msra.mxu0 0
  %495 = vmatprep.subr.bf16.mxu0 0
  %496 = vmatpush1.bf16.msra.mxu0 0
  %497 = vmatprep.subr.bf16.mxu0 0
  %498 = vmatpush1.bf16.msra.mxu0 0
  %499 = vmatprep.subr.bf16.mxu0 0
  %500 = vmatpush1.bf16.msra.mxu0 0
  %501 = vmatprep.mubr.bf16.mxu0 0
  %502 = vmatmul.mubr.bf16.gmra.mrb[0].mxu0 %v467
  %v503 = vpop.f32.mrb[0].mxu0
  %v504 = vadd.f32 %v461, %v503
  %v505 = vpop.f32.mrb[0].mxu0
  %v506 = vadd.f32 %v462, %v505
  %v507 = vpop.f32.mrb[0].mxu0
  %v508 = vpop.f32.mrb[0].mxu0
  %509 = vdwg.mxu0
  %v510 = vxor.u32 %v504, 2147483648
  %v511 = vxor.u32 %v506, 2147483648
  %v512 = vmul.f32 %v510, 1.442695
  %v513 = vpow.pop %v512
  %v514 = vmul.f32 %v511, 1.442695
  %v515 = vpow.pop %v514
  %v516 = vadd.f32 %v513, 1.0
  %v517 = vadd.f32 %v515, 1.0
  %v518 = vrcp.pop %v516
  %v519 = vmul.f32 1.0, %v518
  %v520 = vrcp.pop %v517
  %v521 = vmul.f32 1.0, %v520
  %v522 = vmul.f32 %v521, 2.0
  %v523 = vsub.f32 %v522, 1.0
  %v524 = vmul.f32 %v519, %v454
  %v525 = vmul.f32 %v519, %v523
  %527 = vrot.lane.b32.xlu0 %v525, 64
  %v528 = vpop.permute.xlu0 %527
  %v530 = vadd.f32 %v524, %v528
  %v531 = vtanh.pop %v530
  %v532 = vmul.f32 %v521, %v531
  %v533 = vpack.c.bf16 %v532, %v532
  %s534 = smul.u32 6, 2
  %s535 = smul.addr %s534, 8
  %s536 = scalar_lea.vmem %s0, %s535
  %v537 = vld [vmem:[%s536] sm:$0xff]
  %v538 = vld [vmem:[%s536 + $0x8] sm:$0xff]
  %540 = vrot.lane.b32.xlu0 %v533, 64
  %v541 = vpop.permute.xlu0 %540
  %v543 = vsel %vm81, %v541, 0
  %545 = vmatprep.subr.bf16.mxu0 %v66
  %546 = vmatpush1.bf16.msra.mxu0 %v65
  %547 = vmatprep.subr.bf16.mxu0 %v68
  %548 = vmatpush1.bf16.msra.mxu0 %v67
  %549 = vmatprep.subr.bf16.mxu0 %v70
  %550 = vmatpush1.bf16.msra.mxu0 %v69
  %551 = vmatprep.subr.bf16.mxu0 %v72
  %552 = vmatpush1.bf16.msra.mxu0 %v71
  %553 = vmatprep.subr.bf16.mxu0 0
  %554 = vmatpush1.bf16.msra.mxu0 0
  %555 = vmatprep.subr.bf16.mxu0 0
  %556 = vmatpush1.bf16.msra.mxu0 0
  %557 = vmatprep.subr.bf16.mxu0 0
  %558 = vmatpush1.bf16.msra.mxu0 0
  %559 = vmatprep.subr.bf16.mxu0 0
  %560 = vmatpush1.bf16.msra.mxu0 0
  %561 = vmatprep.subr.bf16.mxu0 0
  %562 = vmatpush1.bf16.msra.mxu0 0
  %563 = vmatprep.subr.bf16.mxu0 0
  %564 = vmatpush1.bf16.msra.mxu0 0
  %565 = vmatprep.subr.bf16.mxu0 0
  %566 = vmatpush1.bf16.msra.mxu0 0
  %567 = vmatprep.subr.bf16.mxu0 0
  %568 = vmatpush1.bf16.msra.mxu0 0
  %569 = vmatprep.subr.bf16.mxu0 0
  %570 = vmatpush1.bf16.msra.mxu0 0
  %571 = vmatprep.subr.bf16.mxu0 0
  %572 = vmatpush1.bf16.msra.mxu0 0
  %573 = vmatprep.subr.bf16.mxu0 0
  %574 = vmatpush1.bf16.msra.mxu0 0
  %575 = vmatprep.subr.bf16.mxu0 0
  %576 = vmatpush1.bf16.msra.mxu0 0
  %577 = vmatprep.mubr.bf16.mxu0 0
  %578 = vmatmul.mubr.bf16.gmra.mrb[0].mxu0 %v543
  %v579 = vpop.f32.mrb[0].mxu0
  %v580 = vadd.f32 %v537, %v579
  %v581 = vpop.f32.mrb[0].mxu0
  %v582 = vadd.f32 %v538, %v581
  %v583 = vpop.f32.mrb[0].mxu0
  %v584 = vpop.f32.mrb[0].mxu0
  %585 = vdwg.mxu0
  %v586 = vxor.u32 %v580, 2147483648
  %v587 = vxor.u32 %v582, 2147483648
  %v588 = vmul.f32 %v586, 1.442695
  %v589 = vpow.pop %v588
  %v590 = vmul.f32 %v587, 1.442695
  %v591 = vpow.pop %v590
  %v592 = vadd.f32 %v589, 1.0
  %v593 = vadd.f32 %v591, 1.0
  %v594 = vrcp.pop %v592
  %v595 = vmul.f32 1.0, %v594
  %v596 = vrcp.pop %v593
  %v597 = vmul.f32 1.0, %v596
  %v598 = vmul.f32 %v597, 2.0
  %v599 = vsub.f32 %v598, 1.0
  %v600 = vmul.f32 %v595, %v530
  %v601 = vmul.f32 %v595, %v599
  %603 = vrot.lane.b32.xlu0 %v601, 64
  %v604 = vpop.permute.xlu0 %603
  %v606 = vadd.f32 %v600, %v604
  %v607 = vtanh.pop %v606
  %v608 = vmul.f32 %v597, %v607
  %v609 = vpack.c.bf16 %v608, %v608
  %s610 = smul.u32 7, 2
  %s611 = smul.addr %s610, 8
  %s612 = scalar_lea.vmem %s0, %s611
  %v613 = vld [vmem:[%s612] sm:$0xff]
  %v614 = vld [vmem:[%s612 + $0x8] sm:$0xff]
  %616 = vrot.lane.b32.xlu0 %v609, 64
  %v617 = vpop.permute.xlu0 %616
  %v619 = vsel %vm81, %v617, 0
  %621 = vmatprep.subr.bf16.mxu0 %v66
  %622 = vmatpush1.bf16.msra.mxu0 %v65
  %623 = vmatprep.subr.bf16.mxu0 %v68
  %624 = vmatpush1.bf16.msra.mxu0 %v67
  %625 = vmatprep.subr.bf16.mxu0 %v70
  %626 = vmatpush1.bf16.msra.mxu0 %v69
  %627 = vmatprep.subr.bf16.mxu0 %v72
  %628 = vmatpush1.bf16.msra.mxu0 %v71
  %629 = vmatprep.subr.bf16.mxu0 0
  %630 = vmatpush1.bf16.msra.mxu0 0
  %631 = vmatprep.subr.bf16.mxu0 0
  %632 = vmatpush1.bf16.msra.mxu0 0
  %633 = vmatprep.subr.bf16.mxu0 0
  %634 = vmatpush1.bf16.msra.mxu0 0
  %635 = vmatprep.subr.bf16.mxu0 0
  %636 = vmatpush1.bf16.msra.mxu0 0
  %637 = vmatprep.subr.bf16.mxu0 0
  %638 = vmatpush1.bf16.msra.mxu0 0
  %639 = vmatprep.subr.bf16.mxu0 0
  %640 = vmatpush1.bf16.msra.mxu0 0
  %641 = vmatprep.subr.bf16.mxu0 0
  %642 = vmatpush1.bf16.msra.mxu0 0
  %643 = vmatprep.subr.bf16.mxu0 0
  %644 = vmatpush1.bf16.msra.mxu0 0
  %645 = vmatprep.subr.bf16.mxu0 0
  %646 = vmatpush1.bf16.msra.mxu0 0
  %647 = vmatprep.subr.bf16.mxu0 0
  %648 = vmatpush1.bf16.msra.mxu0 0
  %649 = vmatprep.subr.bf16.mxu0 0
  %650 = vmatpush1.bf16.msra.mxu0 0
  %651 = vmatprep.subr.bf16.mxu0 0
  %652 = vmatpush1.bf16.msra.mxu0 0
  %653 = vmatprep.mubr.bf16.mxu0 0
  %654 = vmatmul.mubr.bf16.gmra.mrb[0].mxu0 %v619
  %v655 = vpop.f32.mrb[0].mxu0
  %v656 = vadd.f32 %v613, %v655
  %v657 = vpop.f32.mrb[0].mxu0
  %v658 = vadd.f32 %v614, %v657
  %v659 = vpop.f32.mrb[0].mxu0
  %v660 = vpop.f32.mrb[0].mxu0
  %661 = vdwg.mxu0
  %v662 = vxor.u32 %v656, 2147483648
  %v663 = vxor.u32 %v658, 2147483648
  %v664 = vmul.f32 %v662, 1.442695
  %v665 = vpow.pop %v664
  %v666 = vmul.f32 %v663, 1.442695
  %v667 = vpow.pop %v666
  %v668 = vadd.f32 %v665, 1.0
  %v669 = vadd.f32 %v667, 1.0
  %v670 = vrcp.pop %v668
  %v671 = vmul.f32 1.0, %v670
  %v672 = vrcp.pop %v669
  %v673 = vmul.f32 1.0, %v672
  %v674 = vmul.f32 %v673, 2.0
  %v675 = vsub.f32 %v674, 1.0
  %v676 = vmul.f32 %v671, %v606
  %v677 = vmul.f32 %v671, %v675
  %679 = vrot.lane.b32.xlu0 %v677, 64
  %v680 = vpop.permute.xlu0 %679
  %v682 = vadd.f32 %v676, %v680
  %v683 = vtanh.pop %v682
  %v684 = vmul.f32 %v673, %v683
  %686 = vrot.lane.b32.xlu0 %v684, 64
  %v687 = vpop.permute.xlu0 %686
  %689 = vst.msk [vmem:[#allocation2] sm:$0xff] %vm81, %v687
  %691 = vrot.lane.b32.xlu0 %v682, 64
  %v692 = vpop.permute.xlu0 %691
  %694 = vst.msk [vmem:[#allocation3] sm:$0xff] %vm81, %v692
  // Predicated region
  $region22: #{lstm_model_forward.1} parent=0 // pred_check
    %p695 = pneg %p18
  $region23: #{lstm_model_forward.1} parent=0 // pred_check_branch
    %697 = sbr.rel (%p695) target = $region25
  $region24: #{lstm_model_forward.1} parent=0 // pred_region
    %v698 = vld [vmem:[%s2] sm:$0xff]
    %v699 = vld [vmem:[%s2 + $0x8] sm:$0xff]
    %v700 = vld [vmem:[%s2 + $0x10] sm:$0xff]
    %v701 = vld [vmem:[%s2 + $0x18] sm:$0xff]
    %v702 = vld [vmem:[%s2 + $0x20] sm:$0xff]
    %v703 = vld [vmem:[%s2 + $0x28] sm:$0xff]
    %v704 = vld [vmem:[%s2 + $0x30] sm:$0xff]
    %v705 = vld [vmem:[%s2 + $0x38] sm:$0xff]
    %v706 = vld [vmem:[%s3] sm:$0x1]
    %v708 = vlaneseq
    %v709 = vshrl.u32 %v708, 7
    %v710 = vsub.s32 0, %v709
    %v711 = vrot.slane %v706, %v710
    %v713 = vsel %vm81, %v687, 0
    %715 = vmatprep.subr.mxu0 0.0
    %716 = vmatpush1.msra.mxu0 %v698
    %717 = vmatprep.subr.mxu0 0.0
    %718 = vmatpush1.msra.mxu0 %v699
    %719 = vmatprep.subr.mxu0 0.0
    %720 = vmatpush1.msra.mxu0 %v700
    %721 = vmatprep.subr.mxu0 0.0
    %722 = vmatpush1.msra.mxu0 %v701
    %723 = vmatprep.subr.mxu0 0.0
    %724 = vmatpush1.msra.mxu0 %v702
    %725 = vmatprep.subr.mxu0 0.0
    %726 = vmatpush1.msra.mxu0 %v703
    %727 = vmatprep.subr.mxu0 0.0
    %728 = vmatpush1.msra.mxu0 %v704
    %729 = vmatprep.subr.mxu0 0.0
    %730 = vmatpush1.msra.mxu0 %v705
    %731 = vmatprep.subr.mxu0 0.0
    %732 = vmatpush1.msra.mxu0 0.0
    %733 = vmatprep.subr.mxu0 0.0
    %734 = vmatpush1.msra.mxu0 0.0
    %735 = vmatprep.subr.mxu0 0.0
    %736 = vmatpush1.msra.mxu0 0.0
    %737 = vmatprep.subr.mxu0 0.0
    %738 = vmatpush1.msra.mxu0 0.0
    %739 = vmatprep.subr.mxu0 0.0
    %740 = vmatpush1.msra.mxu0 0.0
    %741 = vmatprep.subr.mxu0 0.0
    %742 = vmatpush1.msra.mxu0 0.0
    %743 = vmatprep.subr.mxu0 0.0
    %744 = vmatpush1.msra.mxu0 0.0
    %745 = vmatprep.subr.mxu0 0.0
    %746 = vmatpush1.msra.mxu0 0.0
    %747 = vmatprep.subr.mxu0 0.0
    %748 = vmatpush1.msra.mxu0 0.0
    %749 = vmatprep.subr.mxu0 0.0
    %750 = vmatpush1.msra.mxu0 0.0
    %751 = vmatprep.subr.mxu0 0.0
    %752 = vmatpush1.msra.mxu0 0.0
    %753 = vmatprep.subr.mxu0 0.0
    %754 = vmatpush1.msra.mxu0 0.0
    %755 = vmatprep.subr.mxu0 0.0
    %756 = vmatpush1.msra.mxu0 0.0
    %757 = vmatprep.subr.mxu0 0.0
    %758 = vmatpush1.msra.mxu0 0.0
    %759 = vmatprep.subr.mxu0 0.0
    %760 = vmatpush1.msra.mxu0 0.0
    %761 = vmatprep.subr.mxu0 0.0
    %762 = vmatpush1.msra.mxu0 0.0
    %763 = vmatprep.subr.mxu0 0.0
    %764 = vmatpush1.msra.mxu0 0.0
    %765 = vmatprep.subr.mxu0 0.0
    %766 = vmatpush1.msra.mxu0 0.0
    %767 = vmatprep.subr.mxu0 0.0
    %768 = vmatpush1.msra.mxu0 0.0
    %769 = vmatprep.subr.mxu0 0.0
    %770 = vmatpush1.msra.mxu0 0.0
    %771 = vmatprep.subr.mxu0 0.0
    %772 = vmatpush1.msra.mxu0 0.0
    %773 = vmatprep.subr.mxu0 0.0
    %774 = vmatpush1.msra.mxu0 0.0
    %775 = vmatprep.subr.mxu0 0.0
    %776 = vmatpush1.msra.mxu0 0.0
    %777 = vmatprep.subr.mxu0 0.0
    %778 = vmatpush1.msra.mxu0 0.0
    %779 = vmatprep.mubr.f32.mxu0 0.0
    %780 = vmatmul.mubr.f32.gmra.mrb[0].mxu0 %v713
    %v781 = vpop.f32.mrb[0].mxu0
    %v782 = vadd.f32 %v711, %v781
    %v783 = vpop.f32.mrb[0].mxu0
    %784 = vdwg.mxu0
    %785 = vst [vmem:[%s4] sm:$0xff] %v782
  $region25: #{lstm_model_forward.1} parent=0 // pred_fallthru
    _
  // Predicated region
  $region26: #{lstm_model_forward.1} parent=0 // pred_check
    _
  $region27: #{lstm_model_forward.1} parent=0 // pred_check_branch
    %787 = sbr.rel (0) target = $region29
  $region28: #{lstm_model_forward.1} parent=0 // pred_region
    _
  $region29: #{lstm_model_forward.1} parent=0 // pred_fallthru
    _
  // Predicated region
  $region30: #{lstm_model_forward.1} parent=0 // pred_check
    _
  $region31: #{lstm_model_forward.1} parent=0 // pred_check_branch
    %789 = sbr.rel (0) target = $region33
  $region32: #{lstm_model_forward.1} parent=0 // pred_region
    _
  $region33: #{lstm_model_forward.1} parent=0 // pred_fallthru
    _

</llo_original>
